<compile_context>
chip_gen: v6e
topology: v6e:2x2x1
jax: 0.10.0
libtpu: 0.0.40
codegen_flags: <defaults>
</compile_context>

<pallas_src>
import math

import jax
import jax.numpy as jnp
from jax.experimental import pallas as pl
from jax.experimental.pallas import tpu as pltpu


def make_pos_embedding(d_model: int, max_len: int = 32) -> jnp.ndarray:
    """Deterministic sinusoidal table identical to the PyTorch buffer.

    Returns shape (1, max_len, d_model), float32.
    """
    position = jnp.arange(0, max_len, dtype=jnp.float32)[:, None]          # (L, 1)
    div_term = jnp.exp(
        jnp.arange(0, d_model, 2, dtype=jnp.float32)
        * -(math.log(10000.0) / d_model)
    )                                                                       # (D/2,)
    angles = position * div_term                                            # (L, D/2)
    pe = jnp.zeros((max_len, d_model), dtype=jnp.float32)
    pe = pe.at[:, 0::2].set(jnp.sin(angles))
    pe = pe.at[:, 1::2].set(jnp.cos(angles))
    return pe[None, :, :]                                                   # (1, L, D)


def _posenc_add_kernel(x_ref, pe_ref, o_ref):
    # x_ref: (tb, tc)   pe_ref: (1, tc)   o_ref: (tb, tc)
    # Broadcast-add of the positional tile over the batch sub-tile (VPU only).
    o_ref[...] = x_ref[...] + pe_ref[...]
    # dropout(p=0) is the identity; nothing to do.
    # TODO(synk): non-zero dropout would need pltpu.prng_seed + prng_random_bits masking.


def _choose_tiles(B: int, C: int, itemsize: int, target_tile_bytes: int):
    """Pick (tb, tc) block dims for the (B, C) lane-dense slab.

    tc is a multiple of 128 (or the full dim), tb a multiple of the sublane
    packing (or the full batch), targeting ~target_tile_bytes per x tile.
    """
    target_elems = max(1, target_tile_bytes // itemsize)
    # sublane packing: 8 rows for 32-bit, 16 for 16-bit, 32 for 8-bit dtypes
    sub = 8 * max(1, 4 // itemsize)

    tb_guess = B if B <= sub else sub
    if C % 128 == 0:
        lane_target = max(128, ((target_elems // max(tb_guess, 1)) // 128) * 128)
        tc = min(C, lane_target)
    else:
        # Non-128-divisible S*D: use the full lane extent (a block dim equal
        # to the array dim is always legal).  Fine for this module's modest
        # max_len * d_model.
        tc = C

    if B <= sub:
        tb = B
    else:
        tb = min((B // sub) * sub,
                 max(sub, ((target_elems // tc) // sub) * sub))
    return tb, tc


def positional_encoding_pallas(x: jnp.ndarray,
                               pos_embedding: jnp.ndarray,
                               *,
                               target_tile_bytes: int = 1 << 20) -> jnp.ndarray:
    """x: (B, S, D); pos_embedding: (1, max_len, D).  Returns x + PE[:, :S]."""
    B, S, D = x.shape
    max_len = pos_embedding.shape[1]
    if S > max_len:
        raise ValueError(
            f"sequence length {S} exceeds positional-encoding max_len {max_len}")

    pe = pos_embedding[:, :S, :].astype(x.dtype)      # (1, S, D)

    # Lane-dense 2D slabs: fold (S, D) into the lane axis (free reshape).
    C = S * D
    x2 = x.reshape(B, C)
    pe2 = pe.reshape(1, C)

    itemsize = jnp.dtype(x.dtype).itemsize
    tb, tc = _choose_tiles(B, C, itemsize, target_tile_bytes)
    grid = (pl.cdiv(C, tc), pl.cdiv(B, tb))           # batch axis innermost

    out2 = pl.pallas_call(
        _posenc_add_kernel,
        out_shape=jax.ShapeDtypeStruct((B, C), x.dtype),
        grid_spec=pltpu.PrefetchScalarGridSpec(
            num_scalar_prefetch=0,
            grid=grid,
            in_specs=[
                # x tile: one (tb, tc) slab per (lane-tile, batch-tile) step.
                pl.BlockSpec((tb, tc), lambda c, b: (b, c)),
                # PE tile: index depends only on the lane-tile; with the batch
                # axis innermost the same PE tile is reused (no re-DMA) across
                # all batch steps.
                pl.BlockSpec((1, tc), lambda c, b: (0, c)),
            ],
            out_specs=pl.BlockSpec((tb, tc), lambda c, b: (b, c)),
        ),
        compiler_params=pltpu.CompilerParams(
            dimension_semantics=("parallel", "parallel"),
        ),
    )(x2, pe2)

    return out2.reshape(B, S, D)


def positional_encoding(x: jnp.ndarray, pos_embedding: jnp.ndarray) -> jnp.ndarray:
    """Public entry point.

    Tiny activations are routed to a fused XLA broadcast-add (the pallas_call
    fixed cost dwarfs the work there); larger ones go to the Pallas kernel.
    """
    B, S, D = x.shape
    if S > pos_embedding.shape[1]:
        raise ValueError(
            f"sequence length {S} exceeds positional-encoding max_len "
            f"{pos_embedding.shape[1]}")
    if x.size < 64 * 1024:
        return x + pos_embedding[:, :S, :].astype(x.dtype)
    return positional_encoding_pallas(x, pos_embedding)


if __name__ == "__main__":
    d_model = 32
    max_len = 32
    batch, seq = 2, 8

    key = jax.random.PRNGKey(0)
    x = jax.random.normal(key, (batch, seq, d_model), dtype=jnp.float32)
    pos_embedding = make_pos_embedding(d_model, max_len)

    ref = x + pos_embedding[:, :seq, :]

    # Exercise the Pallas kernel directly (the public wrapper would route this
    # tiny demo shape to the fused XLA add fast-path).
    out = jax.block_until_ready(positional_encoding_pallas(x, pos_embedding))
    assert out.shape == (batch, seq, d_model)
    assert jnp.allclose(out, ref, atol=1e-6, rtol=1e-6), "mismatch vs reference"

    # Multi-tile path: force small tiles so the (lane, batch) grid has several
    # steps and the edge/PE-reuse index maps are exercised.
    x2 = jax.random.normal(jax.random.PRNGKey(1), (16, seq, d_model), jnp.float32)
    ref2 = x2 + pos_embedding[:, :seq, :]
    out2 = jax.block_until_ready(
        positional_encoding_pallas(x2, pos_embedding, target_tile_bytes=4096))
    assert jnp.allclose(out2, ref2, atol=1e-6, rtol=1e-6), "mismatch (tiled path)"

    print("KERNEL_OK")
</pallas_src>

<mosaic_0001>
module attributes {stable_mosaic.version = 11 : i64} {
  func.func @_posenc_add_kernel(%arg0: i32, %arg1: i32, %arg2: memref<2x256xf32, #tpu.memory_space<vmem>>, %arg3: memref<1x256xf32, #tpu.memory_space<vmem>>, %arg4: memref<2x256xf32, #tpu.memory_space<vmem>>) attributes {dimension_semantics = [#tpu.dimension_semantics<parallel>, #tpu.dimension_semantics<parallel>], iteration_bounds = array<i64: 1, 1>, scalar_prefetch = 0 : i64, scratch_operands = 0 : i64, tpu.core_type = #tpu.core_type<tc>, window_params = [{transform_indices = @transform_0, window_bounds = array<i64: 2, 256>}, {transform_indices = @transform_1, window_bounds = array<i64: 1, 256>}, {transform_indices = @transform_2, window_bounds = array<i64: 2, 256>}]} {
    %c0 = arith.constant 0 : index
    %c0_0 = arith.constant 0 : index
    %0 = vector.load %arg2[%c0, %c0_0] : memref<2x256xf32, #tpu.memory_space<vmem>>, vector<2x256xf32>
    %c0_1 = arith.constant 0 : index
    %c0_2 = arith.constant 0 : index
    %1 = vector.load %arg3[%c0_1, %c0_2] : memref<1x256xf32, #tpu.memory_space<vmem>>, vector<1x256xf32>
    %2 = vector.broadcast %1 : vector<1x256xf32> to vector<2x256xf32>
    %3 = arith.addf %0, %2 : vector<2x256xf32>
    %c0_3 = arith.constant 0 : index
    %c0_4 = arith.constant 0 : index
    %4 = vector.load %arg4[%c0_3, %c0_4] : memref<2x256xf32, #tpu.memory_space<vmem>>, vector<2x256xf32>
    tpu.vector_store %arg4[%c0_3, %c0_4], %3 {strides = array<i32>} : memref<2x256xf32, #tpu.memory_space<vmem>>, vector<2x256xf32>,
    return
  }
  func.func @transform_0(%arg0: i32, %arg1: i32) -> (i32, i32) {
    %c0_i32 = arith.constant 0 : i32
    return %arg1, %arg0 : i32, i32
  }
  func.func @transform_1(%arg0: i32, %arg1: i32) -> (i32, i32) {
    %c0_i32 = arith.constant 0 : i32
    %c0_i32_0 = arith.constant 0 : i32
    return %c0_i32, %arg0 : i32, i32
  }
  func.func @transform_2(%arg0: i32, %arg1: i32) -> (i32, i32) {
    %c0_i32 = arith.constant 0 : i32
    return %arg1, %arg0 : i32, i32
  }
}

</mosaic_0001>

<llo_original>
// kernel: tpu_custom_call.1
$region0: #{tpu_custom_call.1}
  #allocation0 [shape = 'u32[]', space=smem, size = 0x4, offset = 0x4, fixed_abs, tag = 'smem constant byte address 0x4 - core index']
  #allocation1 [shape = 'u32[144,128]{1,0:T(1,128)}', space=vmem, size = 0x12000, scoped, tag = 'internal scratch']
  %s0 = inlined_call_operand.hbm [shape: f32[2,256], index: 0, kind: input, shape index: {}]
  %s1 = inlined_call_operand.hbm [shape: f32[1,256], index: 1, kind: input, shape index: {}]
  %s2 = inlined_call_operand.hbm [shape: f32[2,256], index: 2, kind: output, shape index: {}]
  %s3 = sld [smem:[#allocation0]]
  $region26: #{tpu_custom_call.1} parent=0
    _
  %s5 = ssub.s32 1, %s3
  %s6 = scalar_select 0, %s5, %s3
  $region1: #{tpu_custom_call.1} parent=0
    #allocation2 [shape = 'u8[2048]{0}', space=vmem, size = 0x800, scoped, tag = 'input window, operand 0, single buffered']
    #allocation3 [shape = 's32[1]{0}', space=sflag, size = 0x4, scoped, tag = 'scoped memory for tpu_custom_call.1']
    #allocation4 [shape = 's32[1]{0}', space=sflag, size = 0x4, scoped, tag = 'scoped memory for tpu_custom_call.1']
    #allocation5 [shape = 'u8[1024]{0}', space=vmem, size = 0x400, scoped, tag = 'input window, operand 1, single buffered']
    #allocation6 [shape = 's32[1]{0}', space=sflag, size = 0x4, scoped, tag = 'scoped memory for tpu_custom_call.1']
    #allocation7 [shape = 'u8[2048]{0}', space=vmem, size = 0x800, scoped, tag = 'output window, operand 0, single buffered']
    %7 = vsyncpa [#allocation3], 0
    %8 = vsyncpa [#allocation6], 0
    %9 = vsyncpa [#allocation4], 0
    // Predicated region
    $region2: #{tpu_custom_call.1} parent=1 // pred_check
      _
    $region3: #{tpu_custom_call.1} parent=1 // pred_check_branch
      %11 = sbr.rel (0) target = $region5
    $region4: #{tpu_custom_call.1} parent=1 // pred_region
      %s13 = ssub.s32 64, 64
      %14 = vsyncadd [#allocation3], %s13
      %s16 = sshll.u32 [#allocation2], 4
      %s17 = int_to_ptr.vmem [resolvable:$true] %s16
      %19 = dma.hbm_to_vmem [thread:$0]  %s0, 64, %s17, [#allocation3]
    $region5: #{tpu_custom_call.1} parent=1 // pred_fallthru
      _
    // Predicated region
    $region6: #{tpu_custom_call.1} parent=1 // pred_check
      _
    $region7: #{tpu_custom_call.1} parent=1 // pred_check_branch
      %21 = sbr.rel (0) target = $region9
    $region8: #{tpu_custom_call.1} parent=1 // pred_region
      %s23 = ssub.s32 32, 32
      %24 = vsyncadd [#allocation6], %s23
      %s26 = sshll.u32 [#allocation5], 4
      %s27 = int_to_ptr.vmem [resolvable:$true] %s26
      %29 = dma.hbm_to_vmem [thread:$0]  %s1, 32, %s27, [#allocation6]
    $region9: #{tpu_custom_call.1} parent=1 // pred_fallthru
      _
    // Predicated region
    $region10: #{tpu_custom_call.1} parent=1 // pred_check
      _
    $region11: #{tpu_custom_call.1} parent=1 // pred_check_branch
      %31 = sbr.rel (0) target = $region13
    $region12: #{tpu_custom_call.1} parent=1 // pred_region
      %32 = dma.done [#allocation3], 64
    $region13: #{tpu_custom_call.1} parent=1 // pred_fallthru
      _
    // Predicated region
    $region14: #{tpu_custom_call.1} parent=1 // pred_check
      _
    $region15: #{tpu_custom_call.1} parent=1 // pred_check_branch
      %34 = sbr.rel (0) target = $region17
    $region16: #{tpu_custom_call.1} parent=1 // pred_region
      %35 = dma.done [#allocation6], 32
    $region17: #{tpu_custom_call.1} parent=1 // pred_fallthru
      _
    %v36 = vld [vmem:[#allocation2] sm:$0xf]
    %v37 = vld [vmem:[#allocation5] sm:$0x3]
    %v39 = vlaneseq
    %v40 = vshrl.u32 %v39, 7
    %v41 = vsub.s32 0, %v40
    %v42 = vrot.slane %v37, %v41
    %v43 = vlaneseq
    %v44 = vshrl.u32 %v43, 7
    %v45 = vsub.s32 1, %v44
    %v46 = vrot.slane %v37, %v45
    %v47 = vcombine.low %v42, %v46
    %v49 = vunpack.c.l.s4 1983009808
    %v50 = vunpack.c.0.s8 %v49
    %v51 = vlaneseq
    %v52 = vshrl.u32 %v51, 7
    %v53 = vsub.s32 %v50, %v52
    %v54 = vrot.slane %v47, %v53
    %v56 = vadd.f32 %v36, %v54
    %57 = vst [vmem:[#allocation7] sm:$0xf] %v56
    // Predicated region
    $region18: #{tpu_custom_call.1} parent=1 // pred_check
      _
    $region19: #{tpu_custom_call.1} parent=1 // pred_check_branch
      %59 = sbr.rel (0) target = $region21
    $region20: #{tpu_custom_call.1} parent=1 // pred_region
      %s61 = ssub.s32 64, 64
      %62 = vsyncadd [#allocation4], %s61
      %s64 = sshll.u32 [#allocation7], 4
      %s65 = int_to_ptr.vmem [resolvable:$true] %s64
      %67 = dma.vmem_to_hbm [thread:$0]  %s65, 64, %s2, [#allocation4]
    $region21: #{tpu_custom_call.1} parent=1 // pred_fallthru
      _
    // Predicated region
    $region22: #{tpu_custom_call.1} parent=1 // pred_check
      _
    $region23: #{tpu_custom_call.1} parent=1 // pred_check_branch
      %69 = sbr.rel (0) target = $region25
    $region24: #{tpu_custom_call.1} parent=1 // pred_region
      %70 = dma.done [#allocation4], 64
    $region25: #{tpu_custom_call.1} parent=1 // pred_fallthru
      _
    %71 = vsyncpa [#allocation3], 1
    %72 = vsyncpa [#allocation6], 1
    %73 = vsyncpa [#allocation4], 1

</llo_original>
